<compile_context>
chip_gen: v7x
topology: tpu7x:2x2x1
jax: 0.10.0
libtpu: 0.0.40
codegen_flags: <defaults>
</compile_context>

<pallas_src>
import functools

import jax
import jax.numpy as jnp
from jax import lax
from jax.experimental import pallas as pl
from jax.experimental.pallas import tpu as pltpu

SMOOTH = 1e-06
LANES = 128
SUBLANES = 8
MAX_TILE_ROWS = 4096   # (4096,128) f32 tile = 2 MiB  -> 2 inputs x 2 bufs = 8 MiB
SUB_ROWS = 512         # in-kernel accumulation chunk (~256 KiB f32 temporaries)


def _detect_num_tensorcores():
    """2 TensorCores only on v7x; v5e/v6e are single-TC."""
    try:
        kind = jax.devices()[0].device_kind.lower().replace(" ", "")
    except Exception:
        return 1
    if "v7" in kind or "tpu7" in kind:
        return 2
    return 1


def _dice_partial_kernel(p_ref, t_ref, out_ref, acc_i_ref, acc_d_ref, *,
                         inner_steps, tile_rows, sub_rows, num_tiles,
                         last_rows, has_overflow):
    o = pl.program_id(0)   # core / stream-chunk index ("parallel")
    i = pl.program_id(1)   # tile index within the chunk ("arbitrary")

    @pl.when(i == 0)
    def _():
        acc_i_ref[...] = jnp.zeros_like(acc_i_ref)
        acc_d_ref[...] = jnp.zeros_like(acc_d_ref)

    g = o * inner_steps + i   # global tile index

    def do_chunk(r0, nr):
        # nr is static and a multiple of SUBLANES; leading-axis sums are pure
        # sublane-aligned VPU adds (no cross-lane/sublane work in steady state).
        p = p_ref[pl.ds(r0, nr), :].astype(jnp.float32)
        t = t_ref[pl.ds(r0, nr), :].astype(jnp.float32)
        acc_i_ref[...] += (p * t).reshape(nr // SUBLANES, SUBLANES, LANES).sum(axis=0)
        acc_d_ref[...] += (p + t).reshape(nr // SUBLANES, SUBLANES, LANES).sum(axis=0)

    def accum(valid_rows):
        # valid_rows: static Python int, multiple of SUBLANES.
        n_full = valid_rows // sub_rows
        rem = valid_rows % sub_rows
        if n_full == 1 and rem == 0:
            do_chunk(0, valid_rows)
            return
        if n_full > 0:
            def body(s, carry):
                do_chunk(pl.multiple_of(s * sub_rows, sub_rows), sub_rows)
                return carry
            lax.fori_loop(0, n_full, body, 0, unroll=True)
        if rem:
            do_chunk(n_full * sub_rows, rem)

    has_partial = last_rows != tile_rows
    if has_partial:
        # Interior tiles take the unmasked full-tile path; only the single
        # partial last tile uses its statically-known row count.  Overflow
        # tiles (g >= num_tiles, clamped index_map) skip accumulation.
        @pl.when(g < num_tiles - 1)
        def _():
            accum(tile_rows)

        @pl.when(g == num_tiles - 1)
        def _():
            accum(last_rows)
    elif has_overflow:
        @pl.when(g < num_tiles)
        def _():
            accum(tile_rows)
    else:
        accum(tile_rows)

    @pl.when(i == inner_steps - 1)
    def _():
        out_ref[0, 0] = acc_i_ref[...]   # intersection partials
        out_ref[0, 1] = acc_d_ref[...]   # preds.sum() + targets.sum() partials


def dice_loss(preds, targets, smooth=SMOOTH):
    assert preds.shape == targets.shape
    p = preds.reshape(-1)
    t = targets.reshape(-1)
    # Stream narrow native dtypes; bools as int8 (1 B/elem). The cast to f32
    # happens per tile inside the kernel (no extra host-side HBM pass).
    if p.dtype == jnp.bool_:
        p = p.astype(jnp.int8)
    if t.dtype == jnp.bool_:
        t = t.astype(jnp.int8)
    n = p.shape[0]

    align = SUBLANES * LANES            # 1024
    n_main = (n // align) * align       # aligned main stream handled in-kernel

    # Sub-1024-element tail handled with plain jnp (avoids a full-array pad).
    if n_main < n:
        tp = p[n_main:].astype(jnp.float32)
        tt = t[n_main:].astype(jnp.float32)
        tail_inter = jnp.sum(tp * tt)
        tail_denom = jnp.sum(tp) + jnp.sum(tt)
    else:
        tail_inter = jnp.float32(0.0)
        tail_denom = jnp.float32(0.0)

    if n_main == 0:
        inter, denom = tail_inter, tail_denom
    else:
        pm = (p[:n_main] if n_main < n else p).reshape(n_main // LANES, LANES)
        tg = (t[:n_main] if n_main < n else t).reshape(n_main // LANES, LANES)
        rows = n_main // LANES          # multiple of 8 by construction

        if rows >= MAX_TILE_ROWS:
            tile_rows, sub_rows = MAX_TILE_ROWS, SUB_ROWS
        else:
            tile_rows, sub_rows = rows, rows
        nt = pl.cdiv(rows, tile_rows)                  # total row tiles
        last_rows = rows - (nt - 1) * tile_rows        # static, multiple of 8

        ncores = min(_detect_num_tensorcores(), nt)    # 1 on v5e/v6e
        inner = pl.cdiv(nt, ncores)                    # tiles per chunk
        has_overflow = ncores * inner != nt

        if has_overflow:
            # Keep block indices in range; overflow tiles skip accumulation.
            in_map = lambda o, i: (jnp.minimum(o * inner + i, nt - 1), 0)
        else:
            in_map = lambda o, i: (o * inner + i, 0)

        kernel = functools.partial(
            _dice_partial_kernel,
            inner_steps=inner, tile_rows=tile_rows, sub_rows=sub_rows,
            num_tiles=nt, last_rows=last_rows, has_overflow=has_overflow)

        parts = pl.pallas_call(
            kernel,
            out_shape=jax.ShapeDtypeStruct((ncores, 2, SUBLANES, LANES),
                                           jnp.float32),
            grid_spec=pltpu.PrefetchScalarGridSpec(
                num_scalar_prefetch=0,
                grid=(ncores, inner),
                in_specs=[
                    pl.BlockSpec((tile_rows, LANES), in_map),
                    pl.BlockSpec((tile_rows, LANES), in_map),
                ],
                out_specs=pl.BlockSpec((1, 2, SUBLANES, LANES),
                                       lambda o, i: (o, 0, 0, 0)),
                scratch_shapes=[pltpu.VMEM((SUBLANES, LANES), jnp.float32),
                                pltpu.VMEM((SUBLANES, LANES), jnp.float32)],
            ),
            compiler_params=pltpu.CompilerParams(
                dimension_semantics=("parallel", "arbitrary"),
            ),
        )(pm, tg)

        # Final cross-lane/sublane reduce + dice formula on the tiny partials.
        inter = jnp.sum(parts[:, 0]) + tail_inter
        denom = jnp.sum(parts[:, 1]) + tail_denom

    dice = (2.0 * inter + smooth) / (denom + smooth)
    return 1.0 - dice


def _dice_loss_ref(preds, targets, smooth=SMOOTH):
    p = preds.reshape(-1).astype(jnp.float32)
    t = targets.reshape(-1).astype(jnp.float32)
    inter = jnp.sum(p * t)
    dice = (2.0 * inter + smooth) / (jnp.sum(p) + jnp.sum(t) + smooth)
    return 1.0 - dice


if __name__ == "__main__":
    key = jax.random.PRNGKey(0)
    k1, k2, k3, k4, k5, k6 = jax.random.split(key, 6)

    # 1) Small segmentation-like inputs: preds in [0,1], binary f32 targets.
    preds = jax.nn.sigmoid(jax.random.normal(k1, (2, 4, 16, 16), dtype=jnp.float32))
    targets = (jax.random.uniform(k2, (2, 4, 16, 16)) > 0.5).astype(jnp.float32)
    loss = jax.block_until_ready(dice_loss(preds, targets))
    ref = jax.block_until_ready(_dice_loss_ref(preds, targets))
    assert jnp.allclose(loss, ref, atol=1e-5, rtol=1e-5), (loss, ref)

    # 2) Non-1024-multiple element count (tail path) with bool targets
    #    (narrow int8 stream path).
    preds2 = jax.nn.sigmoid(jax.random.normal(k3, (3, 5, 30, 31), dtype=jnp.float32))
    targets2 = jax.random.uniform(k4, (3, 5, 30, 31)) > 0.5
    loss2 = jax.block_until_ready(dice_loss(preds2, targets2))
    ref2 = jax.block_until_ready(_dice_loss_ref(preds2, targets2))
    assert jnp.allclose(loss2, ref2, atol=1e-5, rtol=1e-5), (loss2, ref2)

    # 3) Multi-tile stream with a partial last tile (exercises the tiled path).
    preds3 = jax.nn.sigmoid(jax.random.normal(k5, (4, 8, 130, 128), dtype=jnp.float32))
    targets3 = (jax.random.uniform(k6, (4, 8, 130, 128)) > 0.5).astype(jnp.float32)
    loss3 = jax.block_until_ready(dice_loss(preds3, targets3))
    ref3 = jax.block_until_ready(_dice_loss_ref(preds3, targets3))
    assert jnp.allclose(loss3, ref3, atol=1e-5, rtol=1e-5), (loss3, ref3)

    print("KERNEL_OK")
</pallas_src>

<mosaic_0001>
module attributes {stable_mosaic.version = 11 : i64} {
  func.func @_dice_partial_kernel(%arg0: i32, %arg1: i32, %arg2: memref<16x128xf32, #tpu.memory_space<vmem>>, %arg3: memref<16x128xf32, #tpu.memory_space<vmem>>, %arg4: memref<1x2x8x128xf32, #tpu.memory_space<vmem>>, %arg5: memref<8x128xf32, #tpu.memory_space<vmem>>, %arg6: memref<8x128xf32, #tpu.memory_space<vmem>>) attributes {dimension_semantics = [#tpu.dimension_semantics<parallel>, #tpu.dimension_semantics<arbitrary>], iteration_bounds = array<i64: 1, 1>, scalar_prefetch = 0 : i64, scratch_operands = 2 : i64, tpu.core_type = #tpu.core_type<tc>, window_params = [{transform_indices = @transform_0, window_bounds = array<i64: 16, 128>}, {transform_indices = @transform_1, window_bounds = array<i64: 16, 128>}, {transform_indices = @transform_2, window_bounds = array<i64: 1, 2, 8, 128>}]} {
    %c0_i32 = arith.constant 0 : i32
    %0 = arith.cmpi eq, %arg1, %c0_i32 : i32
    %1 = arith.extui %0 : i1 to i32
    %c0_i32_0 = arith.constant 0 : i32
    %2 = arith.cmpi ne, %1, %c0_i32_0 : i32
    scf.if %2 {
      %cst_15 = arith.constant 0.000000e+00 : f32
      %20 = vector.broadcast %cst_15 : f32 to vector<8x128xf32>
      %c0_16 = arith.constant 0 : index
      %c0_17 = arith.constant 0 : index
      %21 = vector.load %arg5[%c0_16, %c0_17] : memref<8x128xf32, #tpu.memory_space<vmem>>, vector<8x128xf32>
      tpu.vector_store %arg5[%c0_16, %c0_17], %20 {strides = array<i32>} : memref<8x128xf32, #tpu.memory_space<vmem>>, vector<8x128xf32>,
      %cst_18 = arith.constant 0.000000e+00 : f32
      %22 = vector.broadcast %cst_18 : f32 to vector<8x128xf32>
      %c0_19 = arith.constant 0 : index
      %c0_20 = arith.constant 0 : index
      %23 = vector.load %arg6[%c0_19, %c0_20] : memref<8x128xf32, #tpu.memory_space<vmem>>, vector<8x128xf32>
      tpu.vector_store %arg6[%c0_19, %c0_20], %22 {strides = array<i32>} : memref<8x128xf32, #tpu.memory_space<vmem>>, vector<8x128xf32>,
    } else {
    }
    %c0 = arith.constant 0 : index
    %c0_1 = arith.constant 0 : index
    %3 = vector.load %arg2[%c0, %c0_1] : memref<16x128xf32, #tpu.memory_space<vmem>>, vector<16x128xf32>
    %c0_2 = arith.constant 0 : index
    %c0_3 = arith.constant 0 : index
    %4 = vector.load %arg3[%c0_2, %c0_3] : memref<16x128xf32, #tpu.memory_space<vmem>>, vector<16x128xf32>
    %c0_4 = arith.constant 0 : index
    %c0_5 = arith.constant 0 : index
    %5 = vector.load %arg5[%c0_4, %c0_5] : memref<8x128xf32, #tpu.memory_space<vmem>>, vector<8x128xf32>
    %6 = arith.mulf %3, %4 : vector<16x128xf32>
    %7 = vector.shape_cast %6 : vector<16x128xf32> to vector<2x8x128xf32>
    %cst = arith.constant dense<0.000000e+00> : vector<8x128xf32>
    %8 = vector.multi_reduction <add>, %7, %cst [0] : vector<2x8x128xf32> to vector<8x128xf32>
    %9 = arith.addf %5, %8 : vector<8x128xf32>
    %c0_6 = arith.constant 0 : index
    %c0_7 = arith.constant 0 : index
    %10 = vector.load %arg5[%c0_6, %c0_7] : memref<8x128xf32, #tpu.memory_space<vmem>>, vector<8x128xf32>
    tpu.vector_store %arg5[%c0_6, %c0_7], %9 {strides = array<i32>} : memref<8x128xf32, #tpu.memory_space<vmem>>, vector<8x128xf32>,
    %c0_8 = arith.constant 0 : index
    %c0_9 = arith.constant 0 : index
    %11 = vector.load %arg6[%c0_8, %c0_9] : memref<8x128xf32, #tpu.memory_space<vmem>>, vector<8x128xf32>
    %12 = arith.addf %3, %4 : vector<16x128xf32>
    %13 = vector.shape_cast %12 : vector<16x128xf32> to vector<2x8x128xf32>
    %cst_10 = arith.constant dense<0.000000e+00> : vector<8x128xf32>
    %14 = vector.multi_reduction <add>, %13, %cst_10 [0] : vector<2x8x128xf32> to vector<8x128xf32>
    %15 = arith.addf %11, %14 : vector<8x128xf32>
    %c0_11 = arith.constant 0 : index
    %c0_12 = arith.constant 0 : index
    %16 = vector.load %arg6[%c0_11, %c0_12] : memref<8x128xf32, #tpu.memory_space<vmem>>, vector<8x128xf32>
    tpu.vector_store %arg6[%c0_11, %c0_12], %15 {strides = array<i32>} : memref<8x128xf32, #tpu.memory_space<vmem>>, vector<8x128xf32>,
    %c0_i32_13 = arith.constant 0 : i32
    %17 = arith.cmpi eq, %arg1, %c0_i32_13 : i32
    %18 = arith.extui %17 : i1 to i32
    %c0_i32_14 = arith.constant 0 : i32
    %19 = arith.cmpi ne, %18, %c0_i32_14 : i32
    scf.if %19 {
      %c0_15 = arith.constant 0 : index
      %c0_16 = arith.constant 0 : index
      %20 = vector.load %arg5[%c0_15, %c0_16] : memref<8x128xf32, #tpu.memory_space<vmem>>, vector<8x128xf32>
      %c0_17 = arith.constant 0 : index
      %c0_18 = arith.constant 0 : index
      %c0_19 = arith.constant 0 : index
      %c0_20 = arith.constant 0 : index
      %21 = vector.load %arg4[%c0_17, %c0_18, %c0_19, %c0_20] : memref<1x2x8x128xf32, #tpu.memory_space<vmem>>, vector<1x1x8x128xf32>
      %22 = vector.shape_cast %21 : vector<1x1x8x128xf32> to vector<8x128xf32>
      %23 = vector.shape_cast %20 : vector<8x128xf32> to vector<1x1x8x128xf32>
      tpu.vector_store %arg4[%c0_17, %c0_18, %c0_19, %c0_20], %23 {strides = array<i32>} : memref<1x2x8x128xf32, #tpu.memory_space<vmem>>, vector<1x1x8x128xf32>,
      %c0_21 = arith.constant 0 : index
      %c0_22 = arith.constant 0 : index
      %24 = vector.load %arg6[%c0_21, %c0_22] : memref<8x128xf32, #tpu.memory_space<vmem>>, vector<8x128xf32>
      %c0_23 = arith.constant 0 : index
      %c1 = arith.constant 1 : index
      %c0_24 = arith.constant 0 : index
      %c0_25 = arith.constant 0 : index
      %25 = vector.load %arg4[%c0_23, %c1, %c0_24, %c0_25] : memref<1x2x8x128xf32, #tpu.memory_space<vmem>>, vector<1x1x8x128xf32>
      %26 = vector.shape_cast %25 : vector<1x1x8x128xf32> to vector<8x128xf32>
      %27 = vector.shape_cast %24 : vector<8x128xf32> to vector<1x1x8x128xf32>
      tpu.vector_store %arg4[%c0_23, %c1, %c0_24, %c0_25], %27 {strides = array<i32>} : memref<1x2x8x128xf32, #tpu.memory_space<vmem>>, vector<1x1x8x128xf32>,
    } else {
    }
    return
  }
  func.func @transform_0(%arg0: i32, %arg1: i32) -> (i32, i32) {
    %c1_i32 = arith.constant 1 : i32
    %0 = arith.muli %arg0, %c1_i32 : i32
    %1 = arith.addi %0, %arg1 : i32
    %c0_i32 = arith.constant 0 : i32
    %c0_i32_0 = arith.constant 0 : i32
    return %1, %c0_i32 : i32, i32
  }
  func.func @transform_1(%arg0: i32, %arg1: i32) -> (i32, i32) {
    %c1_i32 = arith.constant 1 : i32
    %0 = arith.muli %arg0, %c1_i32 : i32
    %1 = arith.addi %0, %arg1 : i32
    %c0_i32 = arith.constant 0 : i32
    %c0_i32_0 = arith.constant 0 : i32
    return %1, %c0_i32 : i32, i32
  }
  func.func @transform_2(%arg0: i32, %arg1: i32) -> (i32, i32, i32, i32) {
    %c0_i32 = arith.constant 0 : i32
    %c0_i32_0 = arith.constant 0 : i32
    %c0_i32_1 = arith.constant 0 : i32
    %c0_i32_2 = arith.constant 0 : i32
    return %arg0, %c0_i32, %c0_i32_0, %c0_i32_1 : i32, i32, i32, i32
  }
}

</mosaic_0001>

<llo_original>
// kernel: tpu_custom_call.1
$region0: #{tpu_custom_call.1}
  #allocation0 [shape = 'u32[]', space=smem, size = 0x4, offset = 0x4, fixed_abs, tag = 'smem constant byte address 0x4 - core index']
  #allocation1 [shape = 'u32[144,128]{1,0:T(1,128)}', space=vmem, size = 0x12000, scoped, tag = 'internal scratch']
  #allocation2 [shape = 'f32[8,128]{1,0:T(8,128)}', space=vmem, size = 0x1000, scoped, tag = 'scratch operand']
  #allocation3 [shape = 'f32[8,128]{1,0:T(8,128)}', space=vmem, size = 0x1000, scoped, tag = 'scratch operand']
  %s0 = inlined_call_operand.hbm [shape: f32[16,128], index: 0, kind: input, shape index: {}]
  %s1 = inlined_call_operand.hbm [shape: f32[16,128], index: 1, kind: input, shape index: {}]
  %s2 = inlined_call_operand.hbm [shape: f32[1,2,8,128], index: 2, kind: output, shape index: {}]
  %s3 = sld [smem:[#allocation0]]
  $region34: #{tpu_custom_call.1} parent=0
    _
  %s5 = ssub.s32 1, %s3
  %s6 = scalar_select 0, %s5, %s3
  $region1: #{tpu_custom_call.1} parent=0
    #allocation4 [shape = 'u8[8192]{0}', space=vmem, size = 0x2000, scoped, tag = 'input window, operand 0, single buffered']
    #allocation5 [shape = 's32[1]{0}', space=sflag, size = 0x4, scoped, tag = 'scoped memory for tpu_custom_call.1']
    #allocation6 [shape = 's32[1]{0}', space=sflag, size = 0x4, scoped, tag = 'scoped memory for tpu_custom_call.1']
    #allocation7 [shape = 'u8[8192]{0}', space=vmem, size = 0x2000, scoped, tag = 'input window, operand 1, single buffered']
    #allocation8 [shape = 's32[1]{0}', space=sflag, size = 0x4, scoped, tag = 'scoped memory for tpu_custom_call.1']
    #allocation9 [shape = 'u8[8192]{0}', space=vmem, size = 0x2000, scoped, tag = 'output window, operand 0, single buffered']
    %7 = vsyncpa [#allocation5], 0
    %8 = vsyncpa [#allocation8], 0
    %9 = vsyncpa [#allocation6], 0
    // Predicated region
    $region2: #{tpu_custom_call.1} parent=1 // pred_check
      _
    $region3: #{tpu_custom_call.1} parent=1 // pred_check_branch
      %11 = sbr.rel (0) target = $region5
    $region4: #{tpu_custom_call.1} parent=1 // pred_region
      %s12 = sadd.s32 0, 0
      %s13 = smul.u32 2, %s12
      %s15 = ssub.s32 256, 256
      %16 = vsyncadd [#allocation5], %s15
      %s17 = smul.addr %s13, 128
      %s18 = scalar_lea.hbm %s0, %s17
      %s19 = sshll.u32 [#allocation4], 4
      %s20 = int_to_ptr.vmem [resolvable:$true] %s19
      %25 = dma.hbm_to_vmem [thread:$0]  %s18, 256, %s20, [#allocation5], 128, 128, 8
    $region5: #{tpu_custom_call.1} parent=1 // pred_fallthru
      _
    // Predicated region
    $region6: #{tpu_custom_call.1} parent=1 // pred_check
      _
    $region7: #{tpu_custom_call.1} parent=1 // pred_check_branch
      %27 = sbr.rel (0) target = $region9
    $region8: #{tpu_custom_call.1} parent=1 // pred_region
      %s28 = sadd.s32 0, 0
      %s29 = smul.u32 2, %s28
      %s31 = ssub.s32 256, 256
      %32 = vsyncadd [#allocation8], %s31
      %s33 = smul.addr %s29, 128
      %s34 = scalar_lea.hbm %s1, %s33
      %s35 = sshll.u32 [#allocation7], 4
      %s36 = int_to_ptr.vmem [resolvable:$true] %s35
      %41 = dma.hbm_to_vmem [thread:$0]  %s34, 256, %s36, [#allocation8], 128, 128, 8
    $region9: #{tpu_custom_call.1} parent=1 // pred_fallthru
      _
    // Predicated region
    $region10: #{tpu_custom_call.1} parent=1 // pred_check
      _
    $region11: #{tpu_custom_call.1} parent=1 // pred_check_branch
      %43 = sbr.rel (0) target = $region13
    $region12: #{tpu_custom_call.1} parent=1 // pred_region
      %44 = dma.done [#allocation5], 256
    $region13: #{tpu_custom_call.1} parent=1 // pred_fallthru
      _
    // Predicated region
    $region14: #{tpu_custom_call.1} parent=1 // pred_check
      _
    $region15: #{tpu_custom_call.1} parent=1 // pred_check_branch
      %46 = sbr.rel (0) target = $region17
    $region16: #{tpu_custom_call.1} parent=1 // pred_region
      %47 = dma.done [#allocation8], 256
    $region17: #{tpu_custom_call.1} parent=1 // pred_fallthru
      _
    %s48 = sadd.s32 0, 0
    %s49 = smul.u32 2, %s48
    %s50 = sadd.s32 0, 0
    %s51 = smul.u32 2, %s50
    %p52 = scmp.eq.s32.totalorder 0, 0
    // Predicated region
    $region18: #{tpu_custom_call.1} parent=1 // pred_check
      %p53 = pneg %p52
    $region19: #{tpu_custom_call.1} parent=1 // pred_check_branch
      %55 = sbr.rel (%p53) target = $region21
    $region20: #{tpu_custom_call.1} parent=1 // pred_region
      %56 = vst [vmem:[#allocation2] sm:$0xff] 0.0
      %57 = vst [vmem:[#allocation3] sm:$0xff] 0.0
    $region21: #{tpu_custom_call.1} parent=1 // pred_fallthru
      _
    %v58 = vld [vmem:[#allocation4] sm:$0xff]
    %v59 = vld [vmem:[#allocation4 + $0x8] sm:$0xff]
    %v60 = vld [vmem:[#allocation7] sm:$0xff]
    %v61 = vld [vmem:[#allocation7 + $0x8] sm:$0xff]
    %v62 = vld [vmem:[#allocation2] sm:$0xff]
    %v63 = vmul.f32 %v58, %v60
    %v64 = vmul.f32 %v59, %v61
    %v65 = vadd.f32 %v63, %v64
    %v66 = vadd.f32 %v62, %v65
    %67 = vst [vmem:[#allocation2] sm:$0xff] %v66
    %v68 = vld [vmem:[#allocation3] sm:$0xff]
    %v69 = vadd.f32 %v58, %v60
    %v70 = vadd.f32 %v59, %v61
    %v71 = vadd.f32 %v69, %v70
    %v72 = vadd.f32 %v68, %v71
    %73 = vst [vmem:[#allocation3] sm:$0xff] %v72
    // Predicated region
    $region22: #{tpu_custom_call.1} parent=1 // pred_check
      %p74 = pneg %p52
    $region23: #{tpu_custom_call.1} parent=1 // pred_check_branch
      %76 = sbr.rel (%p74) target = $region25
    $region24: #{tpu_custom_call.1} parent=1 // pred_region
      %v77 = vld [vmem:[#allocation2] sm:$0xff]
      %78 = vst [vmem:[#allocation9] sm:$0xff] %v77
      %v79 = vld [vmem:[#allocation3] sm:$0xff]
      %s80 = scalar_lea.vmem [#allocation9], 8
      %81 = vst [vmem:[%s80] sm:$0xff] %v79
    $region25: #{tpu_custom_call.1} parent=1 // pred_fallthru
      _
    // Predicated region
    $region26: #{tpu_custom_call.1} parent=1 // pred_check
      _
    $region27: #{tpu_custom_call.1} parent=1 // pred_check_branch
      %83 = sbr.rel (0) target = $region29
    $region28: #{tpu_custom_call.1} parent=1 // pred_region
      %s85 = ssub.s32 256, 256
      %86 = vsyncadd [#allocation6], %s85
      %s87 = sshll.u32 [#allocation9], 4
      %s88 = int_to_ptr.vmem [resolvable:$true] %s87
      %93 = dma.vmem_to_hbm [thread:$0]  %s88, 256, %s2, [#allocation6], 128, 128, 8
    $region29: #{tpu_custom_call.1} parent=1 // pred_fallthru
      _
    // Predicated region
    $region30: #{tpu_custom_call.1} parent=1 // pred_check
      _
    $region31: #{tpu_custom_call.1} parent=1 // pred_check_branch
      %95 = sbr.rel (0) target = $region33
    $region32: #{tpu_custom_call.1} parent=1 // pred_region
      %96 = dma.done [#allocation6], 256
    $region33: #{tpu_custom_call.1} parent=1 // pred_fallthru
      _
    %97 = vsyncpa [#allocation5], 1
    %98 = vsyncpa [#allocation8], 1
    %99 = vsyncpa [#allocation6], 1

</llo_original>
